<compile_context>
chip_gen: v5e
topology: v5e:2x2
jax: 0.10.0
libtpu: 0.0.40
codegen_flags: <defaults>
</compile_context>

<pallas_src>
import functools

import jax
import jax.numpy as jnp
from jax.experimental import pallas as pl
from jax.experimental.pallas import tpu as pltpu


def _round_up(x, m):
    return (x + m - 1) // m * m


def _vmem_limit_bytes():
    """v7x-safe default (48 MiB); larger scoped limit on v5e/v6e (128 MiB VMEM)."""
    try:
        kind = jax.devices()[0].device_kind.lower()
    except Exception:  # pragma: no cover - defensive
        kind = ""
    if "v5" in kind or "v6" in kind:
        return 96 * 1024 * 1024
    return 48 * 1024 * 1024


def _resident_spec(block_shape):
    """Constant-index-map BlockSpec; single-buffered when supported."""
    index_map = lambda i: (0,) * len(block_shape)
    try:
        return pl.BlockSpec(block_shape, index_map, pipeline_mode=pl.Buffered(1))
    except (AttributeError, TypeError):
        return pl.BlockSpec(block_shape, index_map)


def _sine_layer_kernel(x_ref, w_ref, b_ref, o_ref, *, mxu_dtype):
    # x_ref : (TB, in_features)            input dtype (upcast to f32 in-kernel)
    # w_ref : (3*in_features, out_padded)  mxu_dtype, VMEM-resident
    # b_ref : (1, out_padded)              f32,       VMEM-resident
    # o_ref : (TB, out_padded)             f32
    x = x_ref[...].astype(jnp.float32)

    # Two EUP ops + VPU multiple-angle identities instead of three sines.
    s1 = jnp.sin(x)
    c1 = jnp.cos(x)
    s2 = 2.0 * s1 * c1                     # sin(2x)
    s3 = s1 * (3.0 - 4.0 * s1 * s1)        # sin(3x)

    # One fused MXU dot over K = 3*in_features (column order matches weight.T).
    s = jnp.concatenate([s1, s2, s3], axis=-1).astype(mxu_dtype)
    acc = jnp.dot(s, w_ref[...], preferred_element_type=jnp.float32)
    o_ref[...] = (acc + b_ref[...]).astype(o_ref.dtype)


def prepare_sine_layer_params(weight, bias, *, mxu_dtype=jnp.bfloat16):
    """One-time parameter prep (do NOT run per forward call).

    weight: (out_features, 3*in_features)  -- torch nn.Linear layout
    bias:   (out_features,)
    Returns (w, b_pad, out_features):
      w     : (3*in_features, out_padded)  mxu_dtype (pre-transposed, lane-padded)
      b_pad : (1, out_padded)              f32        (zero-padded)
    """
    out_features, k3 = weight.shape
    assert k3 % 3 == 0, "weight second dim must be 3*in_features"
    out_padded = _round_up(out_features, 128)          # lane-dense output slab
    w_t = jnp.asarray(weight, jnp.float32).T           # (3*in, out)
    w = jnp.pad(w_t, ((0, 0), (0, out_padded - out_features))).astype(mxu_dtype)
    b_pad = jnp.pad(jnp.asarray(bias, jnp.float32),
                    (0, out_padded - out_features)).reshape(1, out_padded)
    return w, b_pad, out_features


def sine_layer(x, w, b_pad, out_features, *, block_batch=1024, slice_output=True):
    """x: (B, in_features) -> (B, out_features).

    With slice_output=False the lane-padded (B, out_padded) slab is returned
    (valid data in [:, :out_features]) so stacked layers avoid an extra HBM copy.
    """
    B, in_features = x.shape
    k3, out_padded = w.shape
    assert k3 == 3 * in_features, "weight must be prepared for this in_features"

    # Batch tile: sublane-aligned (16 for sub-32-bit x, 8 for f32), capped at
    # block_batch; shrink so the 'parallel' grid has >= 2 steps when possible
    # (v7x megacore split + input pipelining).
    sub = 16 if jnp.dtype(x.dtype).itemsize < 4 else 8
    tb = min(block_batch, _round_up(B, sub))
    if B > 2 * sub and pl.cdiv(B, tb) < 2:
        tb = _round_up(pl.cdiv(B, 2), sub)
    grid = (pl.cdiv(B, tb),)

    kernel = functools.partial(_sine_layer_kernel, mxu_dtype=w.dtype)
    out = pl.pallas_call(
        kernel,
        out_shape=jax.ShapeDtypeStruct((B, out_padded), jnp.float32),
        grid=grid,
        in_specs=[
            pl.BlockSpec((tb, in_features), lambda i: (i, 0)),   # batch-tiled
            _resident_spec((k3, out_padded)),                    # weight, resident
            _resident_spec((1, out_padded)),                     # bias, resident
        ],
        out_specs=pl.BlockSpec((tb, out_padded), lambda i: (i, 0)),
        compiler_params=pltpu.CompilerParams(
            dimension_semantics=("parallel",),
            vmem_limit_bytes=_vmem_limit_bytes(),
        ),
    )(x, w, b_pad)

    if slice_output:
        return out[:, :out_features]
    return out
    # TODO(synk): for very large batch tiles on v5e, sub-tile the batch inside
    # the kernel to bound accumulator store pressure (single vst slot).


if __name__ == "__main__":
    B, in_features, out_features = 8, 16, 32
    key = jax.random.PRNGKey(0)
    kx, kw, kb = jax.random.split(key, 3)

    # Deterministic params (mimic nn.Linear's U(-1/sqrt(fan_in), +bound)).
    fan_in = 3 * in_features
    bound = 1.0 / jnp.sqrt(jnp.float32(fan_in))
    weight = jax.random.uniform(kw, (out_features, fan_in), jnp.float32, -bound, bound)
    bias = jax.random.uniform(kb, (out_features,), jnp.float32, -bound, bound)
    x = jax.random.normal(kx, (B, in_features), jnp.float32)

    w, b_pad, out_f = prepare_sine_layer_params(weight, bias)   # one-time prep
    out = sine_layer(x, w, b_pad, out_f)
    out = jax.block_until_ready(out)

    # Pure-JAX f32 reference (matches the PyTorch forward).
    omega = jnp.repeat(jnp.array([1.0, 2.0, 3.0], jnp.float32), in_features).reshape(1, -1)
    ref = jnp.sin(jnp.tile(x, (1, 3)) * omega) @ weight.T + bias
    # bf16 MXU operands with f32 accumulation -> relaxed tolerance.
    err = jnp.max(jnp.abs(out - ref))
    assert out.shape == (B, out_features)
    assert jnp.allclose(out, ref, atol=2e-2, rtol=2e-2), f"max abs err {err}"

    print("KERNEL_OK")
</pallas_src>

<mosaic_0001>
module attributes {stable_mosaic.version = 11 : i64} {
  func.func @_sine_layer_kernel(%arg0: i32, %arg1: memref<8x16xf32, #tpu.memory_space<vmem>>, %arg2: memref<48x128xbf16, #tpu.memory_space<vmem>>, %arg3: memref<1x128xf32, #tpu.memory_space<vmem>>, %arg4: memref<8x128xf32, #tpu.memory_space<vmem>>) attributes {dimension_semantics = [#tpu.dimension_semantics<parallel>], iteration_bounds = array<i64: 1>, scalar_prefetch = 0 : i64, scratch_operands = 0 : i64, tpu.core_type = #tpu.core_type<tc>, window_params = [{transform_indices = @transform_0, window_bounds = array<i64: 8, 16>}, {pipeline_mode = #tpu.pipeline_mode<synchronous>, transform_indices = @transform_1, window_bounds = array<i64: 48, 128>}, {pipeline_mode = #tpu.pipeline_mode<synchronous>, transform_indices = @transform_2, window_bounds = array<i64: 1, 128>}, {transform_indices = @transform_3, window_bounds = array<i64: 8, 128>}]} {
    %c0 = arith.constant 0 : index
    %c0_0 = arith.constant 0 : index
    %0 = vector.load %arg1[%c0, %c0_0] : memref<8x16xf32, #tpu.memory_space<vmem>>, vector<8x16xf32>
    %1 = math.sin %0 : vector<8x16xf32>
    %2 = math.cos %0 : vector<8x16xf32>
    %cst = arith.constant 2.000000e+00 : f32
    %3 = vector.broadcast %cst : f32 to vector<8x16xf32>
    %4 = arith.mulf %3, %1 : vector<8x16xf32>
    %5 = arith.mulf %4, %2 : vector<8x16xf32>
    %cst_1 = arith.constant 4.000000e+00 : f32
    %6 = vector.broadcast %cst_1 : f32 to vector<8x16xf32>
    %7 = arith.mulf %6, %1 : vector<8x16xf32>
    %8 = arith.mulf %7, %1 : vector<8x16xf32>
    %cst_2 = arith.constant 3.000000e+00 : f32
    %9 = vector.broadcast %cst_2 : f32 to vector<8x16xf32>
    %10 = arith.subf %9, %8 : vector<8x16xf32>
    %11 = arith.mulf %1, %10 : vector<8x16xf32>
    %12 = tpu.concatenate %1, %5, %11 in 1 : vector<8x16xf32>, vector<8x16xf32>, vector<8x16xf32> -> vector<8x48xf32>
    %13 = arith.truncf %12 : vector<8x48xf32> to vector<8x48xbf16>
    %c0_3 = arith.constant 0 : index
    %c0_4 = arith.constant 0 : index
    %14 = vector.load %arg2[%c0_3, %c0_4] : memref<48x128xbf16, #tpu.memory_space<vmem>>, vector<48x128xbf16>
    %cst_5 = arith.constant dense<0.000000e+00> : vector<8x128xf32>
    %15 = tpu.matmul %13, %14, %cst_5 {dimension_numbers = #tpu.dot_dimension_numbers<[1], [0], [0], [1], [0, 0, 1, 1], [], []>} : vector<8x48xbf16>, vector<48x128xbf16>, vector<8x128xf32> -> vector<8x128xf32>
    %c0_6 = arith.constant 0 : index
    %c0_7 = arith.constant 0 : index
    %16 = vector.load %arg3[%c0_6, %c0_7] : memref<1x128xf32, #tpu.memory_space<vmem>>, vector<1x128xf32>
    %17 = vector.broadcast %16 : vector<1x128xf32> to vector<8x128xf32>
    %18 = arith.addf %15, %17 : vector<8x128xf32>
    %c0_8 = arith.constant 0 : index
    %c0_9 = arith.constant 0 : index
    %19 = vector.load %arg4[%c0_8, %c0_9] : memref<8x128xf32, #tpu.memory_space<vmem>>, vector<8x128xf32>
    tpu.vector_store %arg4[%c0_8, %c0_9], %18 {strides = array<i32>} : memref<8x128xf32, #tpu.memory_space<vmem>>, vector<8x128xf32>,
    return
  }
  func.func @transform_0(%arg0: i32) -> (i32, i32) {
    %c0_i32 = arith.constant 0 : i32
    %c0_i32_0 = arith.constant 0 : i32
    return %arg0, %c0_i32 : i32, i32
  }
  func.func @transform_1(%arg0: i32) -> (i32, i32) {
    %c0_i32 = arith.constant 0 : i32
    %c0_i32_0 = arith.constant 0 : i32
    %c0_i32_1 = arith.constant 0 : i32
    return %c0_i32, %c0_i32_0 : i32, i32
  }
  func.func @transform_2(%arg0: i32) -> (i32, i32) {
    %c0_i32 = arith.constant 0 : i32
    %c0_i32_0 = arith.constant 0 : i32
    %c0_i32_1 = arith.constant 0 : i32
    return %c0_i32, %c0_i32_0 : i32, i32
  }
  func.func @transform_3(%arg0: i32) -> (i32, i32) {
    %c0_i32 = arith.constant 0 : i32
    %c0_i32_0 = arith.constant 0 : i32
    return %arg0, %c0_i32 : i32, i32
  }
}

</mosaic_0001>

<llo_original>
// kernel: tpu_custom_call.1
$region0: #{tpu_custom_call.1}
  #allocation0 [shape = 'u32[]', space=smem, size = 0x4, offset = 0x4, fixed_abs, tag = 'smem constant byte address 0x4 - core index']
  #allocation1 [shape = 'u32[72,128]{1,0:T(1,128)}', space=vmem, size = 0x9000, scoped, tag = 'internal scratch']
  %s0 = inlined_call_operand.hbm [shape: f32[8,16], index: 0, kind: input, shape index: {}]
  %s1 = inlined_call_operand.hbm [shape: bf16[48,128], index: 1, kind: input, shape index: {}]
  %s2 = inlined_call_operand.vmem [shape: f32[1,128], index: 2, kind: input, shape index: {}]
  %s3 = inlined_call_operand.hbm [shape: f32[8,128], index: 3, kind: output, shape index: {}]
  %s4 = sld [smem:[#allocation0]]
  $region30: #{tpu_custom_call.1} parent=0
    _
  %s6 = ssub.s32 1, %s4
  %s7 = scalar_select 0, %s6, %s4
  $region1: #{tpu_custom_call.1} parent=0
    #allocation2 [shape = 'u8[4096]{0}', space=vmem, size = 0x1000, scoped, tag = 'input window, operand 0, single buffered']
    #allocation3 [shape = 's32[1]{0}', space=sflag, size = 0x4, scoped, tag = 'scoped memory for tpu_custom_call.1']
    #allocation4 [shape = 's32[1]{0}', space=sflag, size = 0x4, scoped, tag = 'scoped memory for tpu_custom_call.1']
    #allocation5 [shape = 'u8[12288]{0}', space=vmem, size = 0x3000, scoped, tag = 'input window, operand 1, single buffered']
    #allocation6 [shape = 's32[1]{0}', space=sflag, size = 0x4, scoped, tag = 'scoped memory for tpu_custom_call.1']
    #allocation7 [shape = 'u8[4096]{0}', space=vmem, size = 0x1000, scoped, tag = 'output window, operand 0, single buffered']
    %8 = vsyncpa [#allocation3], 0
    %9 = vsyncpa [#allocation6], 0
    %10 = vsyncpa [#allocation4], 0
    // Predicated region
    $region2: #{tpu_custom_call.1} parent=1 // pred_check
      _
    $region3: #{tpu_custom_call.1} parent=1 // pred_check_branch
      %12 = sbr.rel (0) target = $region5
    $region4: #{tpu_custom_call.1} parent=1 // pred_region
      %14 = vsyncadd [#allocation3], 0
      %s16 = sshll.u32 %s0, 4
      %s17 = int_to_ptr.hbm [resolvable:$true] %s16
      %s18 = sshll.u32 [#allocation2], 4
      %s19 = int_to_ptr.vmem [resolvable:$true] %s18
      %21 = dma.hbm_to_vmem [thread:$0]  %s17, 128, %s19, [#allocation3]
    $region5: #{tpu_custom_call.1} parent=1 // pred_fallthru
      _
    // Predicated region
    $region6: #{tpu_custom_call.1} parent=1 // pred_check
      _
    $region7: #{tpu_custom_call.1} parent=1 // pred_check_branch
      %23 = sbr.rel (0) target = $region9
    $region8: #{tpu_custom_call.1} parent=1 // pred_region
      %25 = vsyncadd [#allocation6], 0
      %s26 = sshll.u32 %s1, 4
      %s27 = int_to_ptr.hbm [resolvable:$true] %s26
      %s28 = sshll.u32 [#allocation5], 4
      %s29 = int_to_ptr.vmem [resolvable:$true] %s28
      %34 = dma.hbm_to_vmem [thread:$0]  %s27, 384, %s29, [#allocation6], 64, 64, 4
    $region9: #{tpu_custom_call.1} parent=1 // pred_fallthru
      _
    // Predicated region
    $region10: #{tpu_custom_call.1} parent=1 // pred_check
      _
    $region11: #{tpu_custom_call.1} parent=1 // pred_check_branch
      %36 = sbr.rel (0) target = $region13
    $region12: #{tpu_custom_call.1} parent=1 // pred_region
      _
    $region13: #{tpu_custom_call.1} parent=1 // pred_fallthru
      _
    // Predicated region
    $region14: #{tpu_custom_call.1} parent=1 // pred_check
      _
    $region15: #{tpu_custom_call.1} parent=1 // pred_check_branch
      %38 = sbr.rel (0) target = $region17
    $region16: #{tpu_custom_call.1} parent=1 // pred_region
      %40 = dma.done [#allocation3], 128
    $region17: #{tpu_custom_call.1} parent=1 // pred_fallthru
      _
    // Predicated region
    $region18: #{tpu_custom_call.1} parent=1 // pred_check
      _
    $region19: #{tpu_custom_call.1} parent=1 // pred_check_branch
      %42 = sbr.rel (0) target = $region21
    $region20: #{tpu_custom_call.1} parent=1 // pred_region
      %44 = dma.done [#allocation6], 384
    $region21: #{tpu_custom_call.1} parent=1 // pred_fallthru
      _
    %v46 = vld [vmem:[#allocation2] sm:$0xff]
    %v47 = vand.u32 2147483647, %v46
    %vm48 = vcmp.le.f32.partialorder %v47, 0.7853982
    %vm49 = vcmp.lt.s32.totalorder %v46, 0
    %v50 = vand.u32 %v46, 2139095040
    %v51 = vshrl.u32 %v50, 23
    %v52 = vsub.s32 %v51, 127
    %v53 = vand.u32 2147483647, %v46
    %v54 = vand.u32 %v53, 8388607
    %v55 = vor.u32 %v54, 8388608
    %v56 = vsub.s32 0, %v55
    %v57 = vadd.s32 %v52, 1
    %vm58 = vcmp.gt.s32.totalorder %v57, 0
    %v59 = vsel %vm58, %v57, 0
    %v60 = vshrl.u32 %v59, 5
    %v61 = vand.u32 %v59, 31
    %v62 = vsub.s32 32, %v61
    %v63 = vshrl.u32 683565275, %v62
    %v64 = vshll.u32 683565275, %v61
    %v65 = vshrl.u32 2475754826, %v62
    %v66 = vor.u32 %v64, %v65
    %v67 = vshll.u32 2475754826, %v61
    %v68 = vshrl.u32 2131351028, %v62
    %v69 = vor.u32 %v67, %v68
    %v70 = vshll.u32 2131351028, %v61
    %v71 = vshrl.u32 2102212464, %v62
    %v72 = vor.u32 %v70, %v71
    %v73 = vshll.u32 2102212464, %v61
    %v74 = vshrl.u32 920167782, %v62
    %v75 = vor.u32 %v73, %v74
    %v76 = vshll.u32 920167782, %v61
    %v77 = vshrl.u32 1326507024, %v62
    %v78 = vor.u32 %v76, %v77
    %vm79 = vcmp.lt.s32.totalorder %v60, 1
    %vm80 = vcmp.lt.s32.totalorder %v60, 2
    %vm81 = vcmp.lt.s32.totalorder %v60, 3
    %vm82 = vcmp.lt.s32.totalorder %v60, 4
    %v83 = vsel %vm79, %v63, %v66
    %v84 = vsel %vm82, %v72, 2102212464
    %v85 = vsel %vm81, %v69, %v84
    %v86 = vsel %vm80, %v83, %v85
    %v87 = vsel %vm79, %v66, %v69
    %v88 = vsel %vm82, %v75, 920167782
    %v89 = vsel %vm81, %v72, %v88
    %v90 = vsel %vm80, %v87, %v89
    %v91 = vsel %vm79, %v69, %v72
    %v92 = vsel %vm82, %v78, 1326507024
    %v93 = vsel %vm81, %v75, %v92
    %v94 = vsel %vm80, %v91, %v93
    %v95 = vshll.u32 %v55, 8
    %v96 = vand.u32 %v95, 65535
    %v97 = vshrl.u32 %v95, 16
    %v98 = vand.u32 %v94, 65535
    %v99 = vshrl.u32 %v94, 16
    %v100 = vmul.u32 %v96, %v98
    %v101 = vmul.u32 %v96, %v99
    %v102 = vmul.u32 %v97, %v98
    %v103 = vmul.u32 %v97, %v99
    %v104 = vshll.u32 %v101, 16
    %v105 = vshrl.u32 %v101, 16
    %v106 = vshll.u32 %v102, 16
    %v107 = vshrl.u32 %v102, 16
    %vm108 = vc.u32 %v100, %v104
    %v109 = vsel %vm108, 1, 0
    %v110 = vadd.s32 %v100, %v104
    %v111 = vadd.s32 %v103, %v109
    %vm112 = vc.u32 %v110, %v106
    %v113 = vsel %vm112, 1, 0
    %v114 = vadd.s32 %v110, %v106
    %v115 = vadd.s32 %v111, %v113
    %v116 = vadd.s32 %v115, %v105
    %v117 = vadd.s32 %v116, %v107
    %v118 = vand.u32 %v95, 65535
    %v119 = vshrl.u32 %v95, 16
    %v120 = vand.u32 %v90, 65535
    %v121 = vshrl.u32 %v90, 16
    %v122 = vmul.u32 %v118, %v120
    %v123 = vmul.u32 %v118, %v121
    %v124 = vmul.u32 %v119, %v120
    %v125 = vmul.u32 %v119, %v121
    %v126 = vshll.u32 %v123, 16
    %v127 = vshrl.u32 %v123, 16
    %v128 = vshll.u32 %v124, 16
    %v129 = vshrl.u32 %v124, 16
    %vm130 = vc.u32 %v122, %v126
    %v131 = vsel %vm130, 1, 0
    %v132 = vadd.s32 %v122, %v126
    %v133 = vadd.s32 %v125, %v131
    %vm134 = vc.u32 %v132, %v128
    %v135 = vsel %vm134, 1, 0
    %v136 = vadd.s32 %v132, %v128
    %v137 = vadd.s32 %v133, %v135
    %v138 = vadd.s32 %v137, %v127
    %v139 = vadd.s32 %v138, %v129
    %v140 = vmul.u32 %v95, %v86
    %v141 = vadd.s32 %v117, %v136
    %vm142 = vc.u32 %v117, %v136
    %v143 = vadd.s32 %v139, 1
    %v144 = vsel %vm142, %v143, %v139
    %v145 = vadd.s32 %v140, %v144
    %v146 = vadd.s32 %v145, 536870912
    %v147 = vshrl.u32 %v146, 30
    %v148 = vshll.u32 %v147, 30
    %v149 = vsub.s32 %v145, %v148
    %vm150 = vcmp.lt.s32.totalorder %v149, 0
    %v151 = vsub.s32 0, %v149
    %v152 = vsel %vm150, %v151, %v149
    %v153 = vclz %v152
    %v154 = vsub.s32 %v153, 2
    %vm155 = vcmp.gt.s32.totalorder 0, %v154
    %v156 = vsel %vm155, 0, %v154
    %v157 = vsub.s32 32, %v156
    %v158 = vshll.u32 %v149, %v156
    %v159 = vshrl.u32 %v141, %v157
    %v160 = vor.u32 %v158, %v159
    %v161 = vsub.s32 4294967266, %v156
    %v162 = vadd.s32 %v161, 127
    %v163 = vshll.u32 %v162, 23
    %v164 = vor.u32 4788187, %v163
    %v165 = vand.u32 2147483647, %v164
    %v167 = vcvt.s32.f32 %v160
    %v168 = vmul.f32 %v167, %v165
    %v169 = vxor.u32 %v168, 2147483648
    %v170 = vsel %vm49, %v169, %v168
    %v171 = vsub.s32 4, %v147
    %v172 = vsel %vm49, %v171, %v147
    %v173 = vsel %vm48, %v46, %v170
    %v174 = vsel %vm48, 0, %v172
    %v175 = vmul.f32 %v173, %v173
    %v176 = vmul.f32 %v175, -0.001358992
    %v177 = vadd.f32 %v176, 0.041655596
    %v178 = vmul.f32 %v175, %v177
    %v179 = vadd.f32 %v178, -0.4999988
    %v180 = vmul.f32 %v175, %v179
    %v181 = vadd.f32 1.0, %v180
    %v182 = vmul.f32 %v173, %v173
    %v183 = vmul.f32 %v182, -0.00019511016
    %v184 = vadd.f32 %v183, 0.008332121
    %v185 = vmul.f32 %v182, %v184
    %v186 = vadd.f32 %v185, -0.16666654
    %v187 = vmul.f32 %v182, %v186
    %v188 = vadd.f32 %v187, 1.0
    %v189 = vmul.f32 %v188, %v173
    %vm190 = vweird.f32 %v46
    %v191 = vadd.s32 %v174, 3
    %v192 = vand.u32 %v191, 3
    %vm193 = vcmp.lt.s32.totalorder %v192, 2
    %vm194 = vcmp.eq.s32.totalorder %v192, 0
    %v195 = vxor.u32 %v189, 2147483648
    %v196 = vsel %vm194, %v181, %v195
    %vm197 = vcmp.eq.s32.totalorder %v192, 2
    %v198 = vxor.u32 %v181, 2147483648
    %v199 = vsel %vm197, %v198, %v189
    %v200 = vsel %vm193, %v196, %v199
    %v201 = vsel %vm190, nan, %v200
    %v202 = vand.u32 2147483647, %v46
    %vm203 = vcmp.le.f32.partialorder %v202, 0.7853982
    %vm204 = vcmp.lt.s32.totalorder %v46, 0
    %v205 = vand.u32 %v46, 2139095040
    %v206 = vshrl.u32 %v205, 23
    %v207 = vsub.s32 %v206, 127
    %v208 = vand.u32 2147483647, %v46
    %v209 = vand.u32 %v208, 8388607
    %v210 = vor.u32 %v209, 8388608
    %v211 = vsub.s32 0, %v210
    %v212 = vadd.s32 %v207, 1
    %vm213 = vcmp.gt.s32.totalorder %v212, 0
    %v214 = vsel %vm213, %v212, 0
    %v215 = vshrl.u32 %v214, 5
    %v216 = vand.u32 %v214, 31
    %v217 = vsub.s32 32, %v216
    %v218 = vshrl.u32 683565275, %v217
    %v219 = vshll.u32 683565275, %v216
    %v220 = vshrl.u32 2475754826, %v217
    %v221 = vor.u32 %v219, %v220
    %v222 = vshll.u32 2475754826, %v216
    %v223 = vshrl.u32 2131351028, %v217
    %v224 = vor.u32 %v222, %v223
    %v225 = vshll.u32 2131351028, %v216
    %v226 = vshrl.u32 2102212464, %v217
    %v227 = vor.u32 %v225, %v226
    %v228 = vshll.u32 2102212464, %v216
    %v229 = vshrl.u32 920167782, %v217
    %v230 = vor.u32 %v228, %v229
    %v231 = vshll.u32 920167782, %v216
    %v232 = vshrl.u32 1326507024, %v217
    %v233 = vor.u32 %v231, %v232
    %vm234 = vcmp.lt.s32.totalorder %v215, 1
    %vm235 = vcmp.lt.s32.totalorder %v215, 2
    %vm236 = vcmp.lt.s32.totalorder %v215, 3
    %vm237 = vcmp.lt.s32.totalorder %v215, 4
    %v238 = vsel %vm234, %v218, %v221
    %v239 = vsel %vm237, %v227, 2102212464
    %v240 = vsel %vm236, %v224, %v239
    %v241 = vsel %vm235, %v238, %v240
    %v242 = vsel %vm234, %v221, %v224
    %v243 = vsel %vm237, %v230, 920167782
    %v244 = vsel %vm236, %v227, %v243
    %v245 = vsel %vm235, %v242, %v244
    %v246 = vsel %vm234, %v224, %v227
    %v247 = vsel %vm237, %v233, 1326507024
    %v248 = vsel %vm236, %v230, %v247
    %v249 = vsel %vm235, %v246, %v248
    %v250 = vshll.u32 %v210, 8
    %v251 = vand.u32 %v250, 65535
    %v252 = vshrl.u32 %v250, 16
    %v253 = vand.u32 %v249, 65535
    %v254 = vshrl.u32 %v249, 16
    %v255 = vmul.u32 %v251, %v253
    %v256 = vmul.u32 %v251, %v254
    %v257 = vmul.u32 %v252, %v253
    %v258 = vmul.u32 %v252, %v254
    %v259 = vshll.u32 %v256, 16
    %v260 = vshrl.u32 %v256, 16
    %v261 = vshll.u32 %v257, 16
    %v262 = vshrl.u32 %v257, 16
    %vm263 = vc.u32 %v255, %v259
    %v264 = vsel %vm263, 1, 0
    %v265 = vadd.s32 %v255, %v259
    %v266 = vadd.s32 %v258, %v264
    %vm267 = vc.u32 %v265, %v261
    %v268 = vsel %vm267, 1, 0
    %v269 = vadd.s32 %v265, %v261
    %v270 = vadd.s32 %v266, %v268
    %v271 = vadd.s32 %v270, %v260
    %v272 = vadd.s32 %v271, %v262
    %v273 = vand.u32 %v250, 65535
    %v274 = vshrl.u32 %v250, 16
    %v275 = vand.u32 %v245, 65535
    %v276 = vshrl.u32 %v245, 16
    %v277 = vmul.u32 %v273, %v275
    %v278 = vmul.u32 %v273, %v276
    %v279 = vmul.u32 %v274, %v275
    %v280 = vmul.u32 %v274, %v276
    %v281 = vshll.u32 %v278, 16
    %v282 = vshrl.u32 %v278, 16
    %v283 = vshll.u32 %v279, 16
    %v284 = vshrl.u32 %v279, 16
    %vm285 = vc.u32 %v277, %v281
    %v286 = vsel %vm285, 1, 0
    %v287 = vadd.s32 %v277, %v281
    %v288 = vadd.s32 %v280, %v286
    %vm289 = vc.u32 %v287, %v283
    %v290 = vsel %vm289, 1, 0
    %v291 = vadd.s32 %v287, %v283
    %v292 = vadd.s32 %v288, %v290
    %v293 = vadd.s32 %v292, %v282
    %v294 = vadd.s32 %v293, %v284
    %v295 = vmul.u32 %v250, %v241
    %v296 = vadd.s32 %v272, %v291
    %vm297 = vc.u32 %v272, %v291
    %v298 = vadd.s32 %v294, 1
    %v299 = vsel %vm297, %v298, %v294
    %v300 = vadd.s32 %v295, %v299
    %v301 = vadd.s32 %v300, 536870912
    %v302 = vshrl.u32 %v301, 30
    %v303 = vshll.u32 %v302, 30
    %v304 = vsub.s32 %v300, %v303
    %vm305 = vcmp.lt.s32.totalorder %v304, 0
    %v306 = vsub.s32 0, %v304
    %v307 = vsel %vm305, %v306, %v304
    %v308 = vclz %v307
    %v309 = vsub.s32 %v308, 2
    %vm310 = vcmp.gt.s32.totalorder 0, %v309
    %v311 = vsel %vm310, 0, %v309
    %v312 = vsub.s32 32, %v311
    %v313 = vshll.u32 %v304, %v311
    %v314 = vshrl.u32 %v296, %v312
    %v315 = vor.u32 %v313, %v314
    %v316 = vsub.s32 4294967266, %v311
    %v317 = vadd.s32 %v316, 127
    %v318 = vshll.u32 %v317, 23
    %v319 = vor.u32 4788187, %v318
    %v320 = vand.u32 2147483647, %v319
    %v322 = vcvt.s32.f32 %v315
    %v323 = vmul.f32 %v322, %v320
    %v324 = vxor.u32 %v323, 2147483648
    %v325 = vsel %vm204, %v324, %v323
    %v326 = vsub.s32 4, %v302
    %v327 = vsel %vm204, %v326, %v302
    %v328 = vsel %vm203, %v46, %v325
    %v329 = vsel %vm203, 0, %v327
    %v330 = vmul.f32 %v328, %v328
    %v331 = vmul.f32 %v330, -0.001358992
    %v332 = vadd.f32 %v331, 0.041655596
    %v333 = vmul.f32 %v330, %v332
    %v334 = vadd.f32 %v333, -0.4999988
    %v335 = vmul.f32 %v330, %v334
    %v336 = vadd.f32 1.0, %v335
    %v337 = vmul.f32 %v328, %v328
    %v338 = vmul.f32 %v337, -0.00019511016
    %v339 = vadd.f32 %v338, 0.008332121
    %v340 = vmul.f32 %v337, %v339
    %v341 = vadd.f32 %v340, -0.16666654
    %v342 = vmul.f32 %v337, %v341
    %v343 = vadd.f32 %v342, 1.0
    %v344 = vmul.f32 %v343, %v328
    %vm345 = vweird.f32 %v46
    %v346 = vand.u32 %v329, 3
    %vm347 = vcmp.lt.s32.totalorder %v346, 2
    %vm348 = vcmp.eq.s32.totalorder %v346, 0
    %v349 = vxor.u32 %v344, 2147483648
    %v350 = vsel %vm348, %v336, %v349
    %vm351 = vcmp.eq.s32.totalorder %v346, 2
    %v352 = vxor.u32 %v336, 2147483648
    %v353 = vsel %vm351, %v352, %v344
    %v354 = vsel %vm347, %v350, %v353
    %v355 = vsel %vm345, nan, %v354
    %v356 = vmul.f32 %v201, 2.0
    %v357 = vmul.f32 %v356, %v355
    %v358 = vmul.f32 %v201, 4.0
    %v359 = vmul.f32 %v358, %v201
    %v360 = vsub.f32 3.0, %v359
    %v361 = vmul.f32 %v201, %v360
    %363 = vrot.lane.b32.xlu0 %v357, 16
    %v364 = vpop.permute.xlu0 %363
    %367 = vrot.lane.b32.xlu0 %v361, 32
    %v368 = vpop.permute.xlu0 %367
    %vm370 = vcmask 130048
    %v371 = vsel %vm370, %v201, %v364
    %vm372 = vcmask 261120
    %v373 = vsel %vm372, %v371, %v368
    %v374 = vpack.c.bf16 %v373, %v373
    %v375 = vld [vmem:[#allocation5] sm:$0xf]
    %v376 = vld [vmem:[#allocation5 + $0x4] sm:$0xf]
    %v377 = vld [vmem:[#allocation5 + $0x8] sm:$0xf]
    %v378 = vld [vmem:[#allocation5 + $0xc] sm:$0xf]
    %v379 = vld [vmem:[#allocation5 + $0x10] sm:$0xf]
    %v380 = vld [vmem:[#allocation5 + $0x14] sm:$0xf]
    %v381 = vld [vmem:[%s2] sm:$0x1]
    %v383 = vperm.slane %v381, 0
    %v391 = vunpack.c.l.b16 %v375
    %v392 = vunpack.c.l.b16 %v376
    %v393 = vunpack.c.l.b16 %v377
    %v394 = vunpack.c.l.b16 %v378
    %v395 = vunpack.c.l.b16 %v379
    %v396 = vunpack.c.l.b16 %v380
    %v397 = vpack.c.b16 %v392, %v391
    %v398 = vpack.c.b16 %v394, %v393
    %v399 = vpack.c.b16 %v396, %v395
    %vm403 = vcmask 392192
    %v405 = vsel %vm403, %v374, 0
    %407 = vmatpush.bf16.msra.mxu0 0
    %408 = vmatpush.bf16.msra.mxu0 0
    %409 = vmatpush.bf16.msra.mxu0 0
    %410 = vmatpush.bf16.msra.mxu0 0
    %411 = vmatpush.bf16.msra.mxu0 0
    %412 = vmatpush.bf16.msra.mxu0 %v399
    %413 = vmatpush.bf16.msra.mxu0 %v398
    %414 = vmatpush.bf16.msra.mxu0 %v397
    %415 = vmatmul.bf16.gmra.mxu0 %v405
    %v416 = vpop.f32.mrf.mxu0
    %v417 = vadd.f32 %v383, %v416
    %v418 = vpop.f32.mrf.mxu0
    %419 = vdwg.mxu0
    %420 = vst [vmem:[#allocation7] sm:$0xff] %v417
    // Predicated region
    $region22: #{tpu_custom_call.1} parent=1 // pred_check
      _
    $region23: #{tpu_custom_call.1} parent=1 // pred_check_branch
      %422 = sbr.rel (0) target = $region25
    $region24: #{tpu_custom_call.1} parent=1 // pred_region
      %424 = vsyncadd [#allocation4], 0
      %s426 = sshll.u32 [#allocation7], 4
      %s427 = int_to_ptr.vmem [resolvable:$true] %s426
      %s428 = sshll.u32 %s3, 4
      %s429 = int_to_ptr.hbm [resolvable:$true] %s428
      %431 = dma.vmem_to_hbm [thread:$0]  %s427, 128, %s429, [#allocation4]
    $region25: #{tpu_custom_call.1} parent=1 // pred_fallthru
      _
    // Predicated region
    $region26: #{tpu_custom_call.1} parent=1 // pred_check
      _
    $region27: #{tpu_custom_call.1} parent=1 // pred_check_branch
      %433 = sbr.rel (0) target = $region29
    $region28: #{tpu_custom_call.1} parent=1 // pred_region
      %435 = dma.done [#allocation4], 128
    $region29: #{tpu_custom_call.1} parent=1 // pred_fallthru
      _
    %436 = vsyncpa [#allocation3], 1
    %437 = vsyncpa [#allocation6], 1
    %438 = vsyncpa [#allocation4], 1

</llo_original>
